<compile_context>
chip_gen: v7x
topology: tpu7x:2x2x1
jax: 0.10.0
libtpu: 0.0.40
codegen_flags: <defaults>
</compile_context>

<pallas_src>
import functools

import jax
import jax.numpy as jnp
from jax.experimental import pallas as pl
from jax.experimental.pallas import tpu as pltpu

BN_EPS = 1e-5


def _round_up(x, m):
    return ((x + m - 1) // m) * m


def ltocf_kernel(u_t_ref, it_t_ref, m_t_ref, v_ref, k_ref, out_ref):
    # All activations are transposed: (D, TB), batch on the lane axis.
    it_t = it_t_ref[...]                                              # (D, TB)
    # topic^T = M^T @ item^T                                          (MXU)
    topic_t = jnp.dot(m_t_ref[...], it_t, preferred_element_type=jnp.float32)
    # interaction^T = user^T * (item^T + topic^T)                     (VPU)
    inter_t = u_t_ref[...] * (it_t + topic_t)                         # (D, TB)
    # scores = v . inter + k  (folded residual + BN + feature-sum)    (MXU)
    out_ref[...] = (
        jnp.dot(v_ref[...], inter_t, preferred_element_type=jnp.float32)
        + k_ref[0, 0]
    )                                                                 # (1, TB)


def prepare_ltocf_params(topic_matrix, lin_w, lin_b,
                         bn_gamma, bn_beta, bn_rmean, bn_rvar):
    """One-time host-side folding of the Linear + BatchNorm(eval) + sum tail."""
    s = bn_gamma * jax.lax.rsqrt(bn_rvar + BN_EPS)                    # (D,)
    v = s + lin_w.T @ s                                               # (D,)
    k = jnp.dot(lin_b, s) + jnp.sum(bn_beta - bn_rmean * s)           # scalar
    return {
        "topic_matrix_t": topic_matrix.T.astype(jnp.float32),         # (D, D)
        "v_row": v.reshape(1, -1).astype(jnp.float32),                # (1, D)
        "k": k.reshape(1, 1).astype(jnp.float32),                     # (1, 1)
    }


def ltocf_forward(user_emb_t, item_emb_t, folded, tb=1024):
    """user_emb_t/item_emb_t: (D, B) f32, batch on the lane axis -> (B,) scores."""
    D, B = user_emb_t.shape
    tb = min(tb, _round_up(B, 128))            # lane-dense tile, multiple of 128
    b_pad = _round_up(B, tb)
    if b_pad != B:
        pad = ((0, 0), (0, b_pad - B))
        user_emb_t = jnp.pad(user_emb_t, pad)
        item_emb_t = jnp.pad(item_emb_t, pad)

    out = pl.pallas_call(
        ltocf_kernel,
        out_shape=jax.ShapeDtypeStruct((1, b_pad), jnp.float32),
        grid=(b_pad // tb,),
        in_specs=[
            pl.BlockSpec((D, tb), lambda i: (0, i)),            # user^T tile
            pl.BlockSpec((D, tb), lambda i: (0, i)),            # item^T tile
            pl.BlockSpec((D, D), lambda i: (0, 0)),             # M^T (resident)
            pl.BlockSpec((1, D), lambda i: (0, 0)),             # v   (resident)
            pl.BlockSpec(memory_space=pltpu.MemorySpace.SMEM),  # k scalar
        ],
        out_specs=pl.BlockSpec((1, tb), lambda i: (0, i)),       # lane-dense out
        compiler_params=pltpu.CompilerParams(
            dimension_semantics=("parallel",)),                  # v7x 2 TCs
    )(user_emb_t, item_emb_t,
      folded["topic_matrix_t"], folded["v_row"], folded["k"])
    return out[0, :B]


@functools.partial(jax.jit, static_argnames=("tb",))
def ltocf_predict(user_ids, item_ids, user_table_t, item_table_t, folded,
                  tb=1024):
    # Embedding gathers in transposed layout (glue, plain XLA gather).
    user_emb_t = user_table_t[:, user_ids]    # (D, B)
    item_emb_t = item_table_t[:, item_ids]    # (D, B)
    return ltocf_forward(user_emb_t, item_emb_t, folded, tb=tb)


def ltocf_reference(user_ids, item_ids, user_table, item_table, topic_matrix,
                    lin_w, lin_b, bn_gamma, bn_beta, bn_rmean, bn_rvar):
    ue = user_table[user_ids]
    ie = item_table[item_ids]
    topic = ie @ topic_matrix
    inter = ue * (ie + topic)
    res = inter @ lin_w.T + lin_b
    x = inter + res
    normed = (x - bn_rmean) / jnp.sqrt(bn_rvar + BN_EPS) * bn_gamma + bn_beta
    return jnp.sum(normed, axis=1)


if __name__ == "__main__":
    # Small, deterministic synthetic configuration (embedding_dim = module default).
    num_users, num_items, num_topics = 64, 80, 5
    embedding_dim = 64
    batch = 512          # 2 grid steps at tb=256

    key = jax.random.PRNGKey(0)
    (k_ue, k_ie, k_te, k_tm, k_lw, k_lb,
     k_g, k_b, k_m, k_v, k_uid, k_iid) = jax.random.split(key, 12)

    # Parameters (topic_embedding exists in __init__ but is unused by forward()).
    user_table = jax.random.normal(k_ue, (num_users, embedding_dim), jnp.float32)
    item_table = jax.random.normal(k_ie, (num_items, embedding_dim), jnp.float32)
    _topic_table = jax.random.normal(k_te, (num_topics, embedding_dim), jnp.float32)
    topic_matrix = jax.random.normal(k_tm, (embedding_dim, embedding_dim), jnp.float32) * 0.2
    lin_w = jax.random.normal(k_lw, (embedding_dim, embedding_dim), jnp.float32) * 0.1
    lin_b = jax.random.normal(k_lb, (embedding_dim,), jnp.float32) * 0.1
    bn_gamma = 1.0 + 0.1 * jax.random.normal(k_g, (embedding_dim,), jnp.float32)
    bn_beta = 0.1 * jax.random.normal(k_b, (embedding_dim,), jnp.float32)
    bn_rmean = 0.1 * jax.random.normal(k_m, (embedding_dim,), jnp.float32)
    bn_rvar = 0.5 + jnp.abs(jax.random.normal(k_v, (embedding_dim,), jnp.float32)) * 0.5

    # Inputs.
    user_ids = jax.random.randint(k_uid, (batch,), 0, num_users)
    item_ids = jax.random.randint(k_iid, (batch,), 0, num_items)

    # One-time host-side prep (hoisted out of the per-call path).
    folded = prepare_ltocf_params(topic_matrix, lin_w, lin_b,
                                  bn_gamma, bn_beta, bn_rmean, bn_rvar)
    user_table_t = jnp.asarray(user_table.T)   # (D, num_users)
    item_table_t = jnp.asarray(item_table.T)   # (D, num_items)

    scores = ltocf_predict(user_ids, item_ids, user_table_t, item_table_t,
                           folded, tb=256)
    scores = jax.block_until_ready(scores)

    ref = ltocf_reference(user_ids, item_ids, user_table, item_table,
                          topic_matrix, lin_w, lin_b,
                          bn_gamma, bn_beta, bn_rmean, bn_rvar)
    assert scores.shape == (batch,)
    assert jnp.allclose(scores, ref, rtol=1e-3, atol=5e-3), (scores[:8], ref[:8])

    print("KERNEL_OK")
</pallas_src>

<mosaic_0001>
module attributes {stable_mosaic.version = 11 : i64} {
  func.func @ltocf_kernel(%arg0: i32, %arg1: memref<64x256xf32, #tpu.memory_space<vmem>>, %arg2: memref<64x256xf32, #tpu.memory_space<vmem>>, %arg3: memref<64x64xf32, #tpu.memory_space<vmem>>, %arg4: memref<1x64xf32, #tpu.memory_space<vmem>>, %arg5: memref<1x1xf32, #tpu.memory_space<smem>>, %arg6: memref<1x256xf32, #tpu.memory_space<vmem>>) attributes {dimension_semantics = [#tpu.dimension_semantics<parallel>], iteration_bounds = array<i64: 2>, scalar_prefetch = 0 : i64, scratch_operands = 0 : i64, tpu.core_type = #tpu.core_type<tc>, window_params = [{transform_indices = @transform_0, window_bounds = array<i64: 64, 256>}, {transform_indices = @transform_1, window_bounds = array<i64: 64, 256>}, {pipeline_mode = #tpu.pipeline_mode<synchronous>, transform_indices = @transform_2, window_bounds = array<i64: 64, 64>}, {pipeline_mode = #tpu.pipeline_mode<synchronous>, transform_indices = @transform_3, window_bounds = array<i64: 1, 64>}, {transform_indices = @transform_4, window_bounds = array<i64: 1, 1>}, {transform_indices = @transform_5, window_bounds = array<i64: 1, 256>}]} {
    %c0 = arith.constant 0 : index
    %c0_0 = arith.constant 0 : index
    %0 = vector.load %arg2[%c0, %c0_0] : memref<64x256xf32, #tpu.memory_space<vmem>>, vector<64x256xf32>
    %c0_1 = arith.constant 0 : index
    %c0_2 = arith.constant 0 : index
    %1 = vector.load %arg3[%c0_1, %c0_2] : memref<64x64xf32, #tpu.memory_space<vmem>>, vector<64x64xf32>
    %cst = arith.constant dense<0.000000e+00> : vector<64x256xf32>
    %2 = tpu.matmul %1, %0, %cst {dimension_numbers = #tpu.dot_dimension_numbers<[1], [0], [0], [1], [0, 0, 1, 1], [], []>} : vector<64x64xf32>, vector<64x256xf32>, vector<64x256xf32> -> vector<64x256xf32>
    %c0_3 = arith.constant 0 : index
    %c0_4 = arith.constant 0 : index
    %3 = vector.load %arg1[%c0_3, %c0_4] : memref<64x256xf32, #tpu.memory_space<vmem>>, vector<64x256xf32>
    %4 = arith.addf %0, %2 : vector<64x256xf32>
    %5 = arith.mulf %3, %4 : vector<64x256xf32>
    %c0_5 = arith.constant 0 : index
    %c0_6 = arith.constant 0 : index
    %6 = vector.load %arg4[%c0_5, %c0_6] : memref<1x64xf32, #tpu.memory_space<vmem>>, vector<1x64xf32>
    %cst_7 = arith.constant dense<0.000000e+00> : vector<1x256xf32>
    %7 = tpu.matmul %6, %5, %cst_7 {dimension_numbers = #tpu.dot_dimension_numbers<[1], [0], [0], [1], [0, 0, 1, 1], [], []>} : vector<1x64xf32>, vector<64x256xf32>, vector<1x256xf32> -> vector<1x256xf32>
    %c0_8 = arith.constant 0 : index
    %c0_9 = arith.constant 0 : index
    %8 = memref.load %arg5[%c0_8, %c0_9] : memref<1x1xf32, #tpu.memory_space<smem>>
    %9 = vector.broadcast %8 : f32 to vector<1x256xf32>
    %10 = arith.addf %7, %9 : vector<1x256xf32>
    %c0_10 = arith.constant 0 : index
    %c0_11 = arith.constant 0 : index
    %11 = vector.load %arg6[%c0_10, %c0_11] : memref<1x256xf32, #tpu.memory_space<vmem>>, vector<1x256xf32>
    tpu.vector_store %arg6[%c0_10, %c0_11], %10 {strides = array<i32>} : memref<1x256xf32, #tpu.memory_space<vmem>>, vector<1x256xf32>,
    return
  }
  func.func @transform_0(%arg0: i32) -> (i32, i32) {
    %c0_i32 = arith.constant 0 : i32
    %c0_i32_0 = arith.constant 0 : i32
    return %c0_i32, %arg0 : i32, i32
  }
  func.func @transform_1(%arg0: i32) -> (i32, i32) {
    %c0_i32 = arith.constant 0 : i32
    %c0_i32_0 = arith.constant 0 : i32
    return %c0_i32, %arg0 : i32, i32
  }
  func.func @transform_2(%arg0: i32) -> (i32, i32) {
    %c0_i32 = arith.constant 0 : i32
    %c0_i32_0 = arith.constant 0 : i32
    %c0_i32_1 = arith.constant 0 : i32
    return %c0_i32, %c0_i32_0 : i32, i32
  }
  func.func @transform_3(%arg0: i32) -> (i32, i32) {
    %c0_i32 = arith.constant 0 : i32
    %c0_i32_0 = arith.constant 0 : i32
    %c0_i32_1 = arith.constant 0 : i32
    return %c0_i32, %c0_i32_0 : i32, i32
  }
  func.func @transform_4(%arg0: i32) -> (i32, i32) {
    %c0_i32 = arith.constant 0 : i32
    %c0_i32_0 = arith.constant 0 : i32
    %c0_i32_1 = arith.constant 0 : i32
    return %c0_i32, %c0_i32_0 : i32, i32
  }
  func.func @transform_5(%arg0: i32) -> (i32, i32) {
    %c0_i32 = arith.constant 0 : i32
    %c0_i32_0 = arith.constant 0 : i32
    return %c0_i32, %arg0 : i32, i32
  }
}

</mosaic_0001>

<llo_original>
// kernel: ltocf_predict.1
$region0: #{ltocf_predict.1}
  #allocation0 [shape = 'u32[]', space=smem, size = 0x4, offset = 0x4, fixed_abs, tag = 'smem constant byte address 0x4 - core index']
  #allocation1 [shape = 'u32[144,128]{1,0:T(1,128)}', space=vmem, size = 0x12000, scoped, tag = 'internal scratch']
  #allocation2 [shape = 'f32[1,1]{1,0:T(1,128)S(6)}', space=smem, size = 0x200, scoped, tag = 'scoped memory for ltocf_predict.1']
  %s0 = inlined_call_operand.vmem [shape: f32[64,512], index: 0, kind: input, shape index: {}]
  %s1 = inlined_call_operand.vmem [shape: f32[64,512], index: 1, kind: input, shape index: {}]
  %s2 = inlined_call_operand.vmem [shape: f32[64,64], index: 2, kind: input, shape index: {}]
  %s3 = inlined_call_operand.vmem [shape: f32[1,64], index: 3, kind: input, shape index: {}]
  %s4 = inlined_call_operand.<no memory space> [shape: f32[1,1], index: 4, kind: input, shape index: {}]
  %s5 = inlined_call_operand.hbm [shape: f32[1,512], index: 5, kind: output, shape index: {}]
  %s6 = sld [smem:[#allocation0]]
  $region99: #{ltocf_predict.1} parent=0
    _
  %s8 = ssub.s32 1, %s6
  %s9 = scalar_select 0, %s8, %s6
  %10 = sst [smem:[#allocation2]] %s4
  $region1: #{ltocf_predict.1} parent=0
    #allocation3 [shape = 'u8[131072]{0}', space=vmem, size = 0x20000, scoped, tag = 'input window, operand 0']
    #allocation4 [shape = 'u8[131072]{0}', space=vmem, size = 0x20000, scoped, tag = 'input window, operand 1']
    #allocation5 [shape = 'u8[2048]{0}', space=vmem, size = 0x800, scoped, tag = 'output window, operand 0']
    #allocation6 [shape = 's32[2]{0}', space=sflag, size = 0x8, scoped, tag = 'scoped memory for ltocf_predict.1']
    %11 = vsyncpa [#allocation6], 0
    %s12 = scalar_lea.sflag [#allocation6], 1
    %13 = vsyncpa %s12, 0
    loop: start=0, step=1, limit=4
    $region2: #{ltocf_predict.1} parent=1 // loop_pre_header
      _
    $region3: #{ltocf_predict.1} parent=1 // loop_header
      %s15 = sphi 0, %s19
      %p16 = scmp.ge.s32.totalorder %s15, 4
      %s25 = sphi 0, %s27
      %s28 = sphi 0, %s25
      %s29 = sphi 0, %s28
      %s45 = sphi 0, %s29
      %s51 = sphi 0, %s53
      %s54 = sphi 0, %s51
      %s55 = sphi 0, %s54
      %s71 = sphi 0, %s55
      %s75 = sphi 0, %s75
      %s77 = sphi 0, %s75
      %s78 = sphi 0, %s77
      %s92 = sphi 0, %s78
      %s96 = sphi 0, %s96
      %s98 = sphi 0, %s96
      %s99 = sphi 0, %s98
      %s113 = sphi 0, %s99
      %s117 = sphi 0, %s117
      %s119 = sphi 0, %s117
      %s120 = sphi 0, %s119
      %s134 = sphi 0, %s120
      %s140 = sphi 0, %s142
      %s143 = sphi 0, %s140
      %s144 = sphi 0, %s143
      %s160 = sphi 0, %s144
    $region4: #{ltocf_predict.1} parent=1 // loop_header_branch
      %18 = sbr.rel (%p16) target = $region8
    $region5: #{ltocf_predict.1} parent=1 // loop_body
      %s20 = ssub.s32 %s15, 1
      %s21 = ssub.s32 %s15, 2
      %s22 = sadd.s32 %s15, 1
      %s23 = ssub.s32 %s15, %s22
      %p24 = scmp.eq.s32.totalorder %s23, 0
      %s26 = sadd.s32 %s25, 1
      %s27 = scalar_select %p24, %s25, %s26
      %p30 = pneg %p24
      %p31 = scmp.eq.s32.totalorder %s15, 1
      %p32 = por %p30, %p31
      %p33 = scmp.ne.s32.totalorder %s25, %s28
      %p34 = scmp.eq.s32.totalorder %s15, 0
      %p35 = por %p33, %p34
      %p36 = scmp.ne.s32.totalorder %s25, %s28
      %p37 = scmp.eq.s32.totalorder %s20, 1
      %p38 = por %p36, %p37
      %p39 = scmp.ne.s32.totalorder %s28, %s29
      %p40 = scmp.eq.s32.totalorder %s20, 0
      %p41 = por %p39, %p40
      %p42 = scmp.ne.s32.totalorder %s28, %s29
      %p43 = scmp.eq.s32.totalorder %s21, 1
      %p44 = por %p42, %p43
      %p46 = scmp.ne.s32.totalorder %s29, %s45
      %p47 = scmp.eq.s32.totalorder %s21, 0
      %p48 = por %p46, %p47
      %s49 = ssub.s32 %s15, %s22
      %p50 = scmp.eq.s32.totalorder %s49, 0
      %s52 = sadd.s32 %s51, 1
      %s53 = scalar_select %p50, %s51, %s52
      %p56 = pneg %p50
      %p57 = scmp.eq.s32.totalorder %s15, 1
      %p58 = por %p56, %p57
      %p59 = scmp.ne.s32.totalorder %s51, %s54
      %p60 = scmp.eq.s32.totalorder %s15, 0
      %p61 = por %p59, %p60
      %p62 = scmp.ne.s32.totalorder %s51, %s54
      %p63 = scmp.eq.s32.totalorder %s20, 1
      %p64 = por %p62, %p63
      %p65 = scmp.ne.s32.totalorder %s54, %s55
      %p66 = scmp.eq.s32.totalorder %s20, 0
      %p67 = por %p65, %p66
      %p68 = scmp.ne.s32.totalorder %s54, %s55
      %p69 = scmp.eq.s32.totalorder %s21, 1
      %p70 = por %p68, %p69
      %p72 = scmp.ne.s32.totalorder %s55, %s71
      %p73 = scmp.eq.s32.totalorder %s21, 0
      %p74 = por %p72, %p73
      %s76 = sadd.s32 %s75, 1
      %p79 = scmp.eq.s32.totalorder %s15, 1
      %p80 = scmp.ne.s32.totalorder %s75, %s77
      %p81 = scmp.eq.s32.totalorder %s15, 0
      %p82 = por %p80, %p81
      %p83 = scmp.ne.s32.totalorder %s75, %s77
      %p84 = scmp.eq.s32.totalorder %s20, 1
      %p85 = por %p83, %p84
      %p86 = scmp.ne.s32.totalorder %s77, %s78
      %p87 = scmp.eq.s32.totalorder %s20, 0
      %p88 = por %p86, %p87
      %p89 = scmp.ne.s32.totalorder %s77, %s78
      %p90 = scmp.eq.s32.totalorder %s21, 1
      %p91 = por %p89, %p90
      %p93 = scmp.ne.s32.totalorder %s78, %s92
      %p94 = scmp.eq.s32.totalorder %s21, 0
      %p95 = por %p93, %p94
      %s97 = sadd.s32 %s96, 1
      %p100 = scmp.eq.s32.totalorder %s15, 1
      %p101 = scmp.ne.s32.totalorder %s96, %s98
      %p102 = scmp.eq.s32.totalorder %s15, 0
      %p103 = por %p101, %p102
      %p104 = scmp.ne.s32.totalorder %s96, %s98
      %p105 = scmp.eq.s32.totalorder %s20, 1
      %p106 = por %p104, %p105
      %p107 = scmp.ne.s32.totalorder %s98, %s99
      %p108 = scmp.eq.s32.totalorder %s20, 0
      %p109 = por %p107, %p108
      %p110 = scmp.ne.s32.totalorder %s98, %s99
      %p111 = scmp.eq.s32.totalorder %s21, 1
      %p112 = por %p110, %p111
      %p114 = scmp.ne.s32.totalorder %s99, %s113
      %p115 = scmp.eq.s32.totalorder %s21, 0
      %p116 = por %p114, %p115
      %s118 = sadd.s32 %s117, 1
      %p121 = scmp.eq.s32.totalorder %s15, 1
      %p122 = scmp.ne.s32.totalorder %s117, %s119
      %p123 = scmp.eq.s32.totalorder %s15, 0
      %p124 = por %p122, %p123
      %p125 = scmp.ne.s32.totalorder %s117, %s119
      %p126 = scmp.eq.s32.totalorder %s20, 1
      %p127 = por %p125, %p126
      %p128 = scmp.ne.s32.totalorder %s119, %s120
      %p129 = scmp.eq.s32.totalorder %s20, 0
      %p130 = por %p128, %p129
      %p131 = scmp.ne.s32.totalorder %s119, %s120
      %p132 = scmp.eq.s32.totalorder %s21, 1
      %p133 = por %p131, %p132
      %p135 = scmp.ne.s32.totalorder %s120, %s134
      %p136 = scmp.eq.s32.totalorder %s21, 0
      %p137 = por %p135, %p136
      %s138 = ssub.s32 %s15, %s22
      %p139 = scmp.eq.s32.totalorder %s138, 0
      %s141 = sadd.s32 %s140, 1
      %s142 = scalar_select %p139, %s140, %s141
      %p145 = pneg %p139
      %p146 = scmp.eq.s32.totalorder %s15, 1
      %p147 = por %p145, %p146
      %p148 = scmp.ne.s32.totalorder %s140, %s143
      %p149 = scmp.eq.s32.totalorder %s15, 0
      %p150 = por %p148, %p149
      %p151 = scmp.ne.s32.totalorder %s140, %s143
      %p152 = scmp.eq.s32.totalorder %s20, 1
      %p153 = por %p151, %p152
      %p154 = scmp.ne.s32.totalorder %s143, %s144
      %p155 = scmp.eq.s32.totalorder %s20, 0
      %p156 = por %p154, %p155
      %p157 = scmp.ne.s32.totalorder %s143, %s144
      %p158 = scmp.eq.s32.totalorder %s21, 1
      %p159 = por %p157, %p158
      %p161 = scmp.ne.s32.totalorder %s144, %s160
      %p162 = scmp.eq.s32.totalorder %s21, 0
      %p163 = por %p161, %p162
      %p164 = scmp.le.s32.totalorder 1, %s15
      %p165 = scmp.lt.s32.totalorder %s15, 3
      %p166 = pnand %p164, %p165
      %p167 = pneg %p166
      // Predicated region
      $region9: #{ltocf_predict.1} parent=5 // pred_check
        _
      $region10: #{ltocf_predict.1} parent=5 // pred_check_branch
        %169 = sbr.rel (%p166) target = $region12
      $region11: #{ltocf_predict.1} parent=5 // pred_region
        %s170 = ssub.s32 %s15, 1
        // Predicated region
        $region13: #{ltocf_predict.1} parent=11 // pred_check
          %p171 = pneg %p88
        $region14: #{ltocf_predict.1} parent=11 // pred_check_branch
          %173 = sbr.rel (%p171) target = $region16
        $region15: #{ltocf_predict.1} parent=11 // pred_region
          _
        $region16: #{ltocf_predict.1} parent=11 // pred_fallthru
          _
        // Predicated region
        $region17: #{ltocf_predict.1} parent=11 // pred_check
          %p174 = pneg %p109
        $region18: #{ltocf_predict.1} parent=11 // pred_check_branch
          %176 = sbr.rel (%p174) target = $region20
        $region19: #{ltocf_predict.1} parent=11 // pred_region
          _
        $region20: #{ltocf_predict.1} parent=11 // pred_fallthru
          _
        // Predicated region
        $region21: #{ltocf_predict.1} parent=11 // pred_check
          %p177 = pneg %p130
        $region22: #{ltocf_predict.1} parent=11 // pred_check_branch
          %179 = sbr.rel (%p177) target = $region24
        $region23: #{ltocf_predict.1} parent=11 // pred_region
          _
        $region24: #{ltocf_predict.1} parent=11 // pred_fallthru
          _
      $region12: #{ltocf_predict.1} parent=5 // pred_fallthru
        _
      %p180 = scmp.lt.s32.totalorder %s15, 2
      // Predicated region
      $region25: #{ltocf_predict.1} parent=5 // pred_check
        %p181 = pneg %p180
      $region26: #{ltocf_predict.1} parent=5 // pred_check_branch
        %183 = sbr.rel (%p181) target = $region28
      $region27: #{ltocf_predict.1} parent=5 // pred_region
        // Predicated region
        $region29: #{ltocf_predict.1} parent=27 // pred_check
          %p184 = pneg %p35
        $region30: #{ltocf_predict.1} parent=27 // pred_check_branch
          %186 = sbr.rel (%p184) target = $region32
        $region31: #{ltocf_predict.1} parent=27 // pred_region
          %s187 = sand.u32 %s25, 1
          %s188 = sand.u32 %s25, 1
          %s189 = smul.addr %s188, 128
          %s190 = scalar_lea.vmem [#allocation3], %s189
          %s191 = smul.u32 2, %s15
          %s192 = smul.addr %s191, 8
          %s193 = scalar_lea.vmem %s0, %s192
          // Predicated region
          $region33: #{ltocf_predict.1} parent=31 // pred_check
            _
          $region34: #{ltocf_predict.1} parent=31 // pred_check_branch
            %195 = sbr.rel (0) target = $region36
          $region35: #{ltocf_predict.1} parent=31 // pred_region
            // Predicated region
            $region37: #{ltocf_predict.1} parent=35 // pred_check
              _
            $region38: #{ltocf_predict.1} parent=35 // pred_check_branch
              %197 = sbr.rel (0) target = $region40
            $region39: #{ltocf_predict.1} parent=35 // pred_region
              loop: start=0, step=1, limit=1
              $region41: #{ltocf_predict.1} parent=39 // loop_pre_header
                _
              $region42: #{ltocf_predict.1} parent=39 // loop_header
                %s199 = sphi 0, %s203
                %p200 = scmp.ge.s32.totalorder %s199, 1
                %s204 = sphi %s193, %s193
                %s205 = sphi %s190, %s190
              $region43: #{ltocf_predict.1} parent=39 // loop_header_branch
                %202 = sbr.rel (%p200) target = $region47
              $region44: #{ltocf_predict.1} parent=39 // loop_body
                %v206 = vld [vmem:[%s204] sm:$0xff]
                %207 = vst [vmem:[%s205] sm:$0xff] %v206
                %v208 = vld [vmem:[%s204 + $0x8] sm:$0xff]
                %209 = vst [vmem:[%s205 + $0x8] sm:$0xff] %v208
                %v210 = vld [vmem:[%s204 + $0x20] sm:$0xff]
                %211 = vst [vmem:[%s205 + $0x10] sm:$0xff] %v210
                %v212 = vld [vmem:[%s204 + $0x28] sm:$0xff]
                %213 = vst [vmem:[%s205 + $0x18] sm:$0xff] %v212
                %v214 = vld [vmem:[%s204 + $0x40] sm:$0xff]
                %215 = vst [vmem:[%s205 + $0x20] sm:$0xff] %v214
                %v216 = vld [vmem:[%s204 + $0x48] sm:$0xff]
                %217 = vst [vmem:[%s205 + $0x28] sm:$0xff] %v216
                %v218 = vld [vmem:[%s204 + $0x60] sm:$0xff]
                %219 = vst [vmem:[%s205 + $0x30] sm:$0xff] %v218
                %v220 = vld [vmem:[%s204 + $0x68] sm:$0xff]
                %221 = vst [vmem:[%s205 + $0x38] sm:$0xff] %v220
                %v222 = vld [vmem:[%s204 + $0x80] sm:$0xff]
                %223 = vst [vmem:[%s205 + $0x40] sm:$0xff] %v222
                %v224 = vld [vmem:[%s204 + $0x88] sm:$0xff]
                %225 = vst [vmem:[%s205 + $0x48] sm:$0xff] %v224
                %v226 = vld [vmem:[%s204 + $0xa0] sm:$0xff]
                %227 = vst [vmem:[%s205 + $0x50] sm:$0xff] %v226
                %v228 = vld [vmem:[%s204 + $0xa8] sm:$0xff]
                %229 = vst [vmem:[%s205 + $0x58] sm:$0xff] %v228
                %v230 = vld [vmem:[%s204 + $0xc0] sm:$0xff]
                %231 = vst [vmem:[%s205 + $0x60] sm:$0xff] %v230
                %v232 = vld [vmem:[%s204 + $0xc8] sm:$0xff]
                %233 = vst [vmem:[%s205 + $0x68] sm:$0xff] %v232
                %v234 = vld [vmem:[%s204 + $0xe0] sm:$0xff]
                %235 = vst [vmem:[%s205 + $0x70] sm:$0xff] %v234
                %v236 = vld [vmem:[%s204 + $0xe8] sm:$0xff]
                %237 = vst [vmem:[%s205 + $0x78] sm:$0xff] %v236
              $region45: #{ltocf_predict.1} parent=39 // loop_footer
                %s203 = sadd.s32 1, %s199
              $region46: #{ltocf_predict.1} parent=39 // loop_footer_branch
                %198 = sbr.rel target = $region42
              $region47: #{ltocf_predict.1} parent=39 // loop_exit
                _
            $region40: #{ltocf_predict.1} parent=35 // pred_fallthru
              _
            // Predicated region
            $region48: #{ltocf_predict.1} parent=35 // pred_check
              _
            $region49: #{ltocf_predict.1} parent=35 // pred_check_branch
              %239 = sbr.rel target = $region51
            $region50: #{ltocf_predict.1} parent=35 // pred_region
              _
            $region51: #{ltocf_predict.1} parent=35 // pred_fallthru
              _
          $region36: #{ltocf_predict.1} parent=31 // pred_fallthru
            _
          %240 = vnop
        $region32: #{ltocf_predict.1} parent=27 // pred_fallthru
          _
        // Predicated region
        $region52: #{ltocf_predict.1} parent=27 // pred_check
          %p241 = pneg %p61
        $region53: #{ltocf_predict.1} parent=27 // pred_check_branch
          %243 = sbr.rel (%p241) target = $region55
        $region54: #{ltocf_predict.1} parent=27 // pred_region
          %s244 = sand.u32 %s51, 1
          %s245 = sand.u32 %s51, 1
          %s246 = smul.addr %s245, 128
          %s247 = scalar_lea.vmem [#allocation4], %s246
          %s248 = smul.u32 2, %s15
          %s249 = smul.addr %s248, 8
          %s250 = scalar_lea.vmem %s1, %s249
          // Predicated region
          $region56: #{ltocf_predict.1} parent=54 // pred_check
            _
          $region57: #{ltocf_predict.1} parent=54 // pred_check_branch
            %252 = sbr.rel (0) target = $region59
          $region58: #{ltocf_predict.1} parent=54 // pred_region
            // Predicated region
            $region60: #{ltocf_predict.1} parent=58 // pred_check
              _
            $region61: #{ltocf_predict.1} parent=58 // pred_check_branch
              %254 = sbr.rel (0) target = $region63
            $region62: #{ltocf_predict.1} parent=58 // pred_region
              loop: start=0, step=1, limit=1
              $region64: #{ltocf_predict.1} parent=62 // loop_pre_header
                _
              $region65: #{ltocf_predict.1} parent=62 // loop_header
                %s256 = sphi 0, %s260
                %p257 = scmp.ge.s32.totalorder %s256, 1
                %s261 = sphi %s250, %s250
                %s262 = sphi %s247, %s247
              $region66: #{ltocf_predict.1} parent=62 // loop_header_branch
                %259 = sbr.rel (%p257) target = $region70
              $region67: #{ltocf_predict.1} parent=62 // loop_body
                %v263 = vld [vmem:[%s261] sm:$0xff]
                %264 = vst [vmem:[%s262] sm:$0xff] %v263
                %v265 = vld [vmem:[%s261 + $0x8] sm:$0xff]
                %266 = vst [vmem:[%s262 + $0x8] sm:$0xff] %v265
                %v267 = vld [vmem:[%s261 + $0x20] sm:$0xff]
                %268 = vst [vmem:[%s262 + $0x10] sm:$0xff] %v267
                %v269 = vld [vmem:[%s261 + $0x28] sm:$0xff]
                %270 = vst [vmem:[%s262 + $0x18] sm:$0xff] %v269
                %v271 = vld [vmem:[%s261 + $0x40] sm:$0xff]
                %272 = vst [vmem:[%s262 + $0x20] sm:$0xff] %v271
                %v273 = vld [vmem:[%s261 + $0x48] sm:$0xff]
                %274 = vst [vmem:[%s262 + $0x28] sm:$0xff] %v273
                %v275 = vld [vmem:[%s261 + $0x60] sm:$0xff]
                %276 = vst [vmem:[%s262 + $0x30] sm:$0xff] %v275
                %v277 = vld [vmem:[%s261 + $0x68] sm:$0xff]
                %278 = vst [vmem:[%s262 + $0x38] sm:$0xff] %v277
                %v279 = vld [vmem:[%s261 + $0x80] sm:$0xff]
                %280 = vst [vmem:[%s262 + $0x40] sm:$0xff] %v279
                %v281 = vld [vmem:[%s261 + $0x88] sm:$0xff]
                %282 = vst [vmem:[%s262 + $0x48] sm:$0xff] %v281
                %v283 = vld [vmem:[%s261 + $0xa0] sm:$0xff]
                %284 = vst [vmem:[%s262 + $0x50] sm:$0xff] %v283
                %v285 = vld [vmem:[%s261 + $0xa8] sm:$0xff]
                %286 = vst [vmem:[%s262 + $0x58] sm:$0xff] %v285
                %v287 = vld [vmem:[%s261 + $0xc0] sm:$0xff]
                %288 = vst [vmem:[%s262 + $0x60] sm:$0xff] %v287
                %v289 = vld [vmem:[%s261 + $0xc8] sm:$0xff]
                %290 = vst [vmem:[%s262 + $0x68] sm:$0xff] %v289
                %v291 = vld [vmem:[%s261 + $0xe0] sm:$0xff]
                %292 = vst [vmem:[%s262 + $0x70] sm:$0xff] %v291
                %v293 = vld [vmem:[%s261 + $0xe8] sm:$0xff]
                %294 = vst [vmem:[%s262 + $0x78] sm:$0xff] %v293
              $region68: #{ltocf_predict.1} parent=62 // loop_footer
                %s260 = sadd.s32 1, %s256
              $region69: #{ltocf_predict.1} parent=62 // loop_footer_branch
                %255 = sbr.rel target = $region65
              $region70: #{ltocf_predict.1} parent=62 // loop_exit
                _
            $region63: #{ltocf_predict.1} parent=58 // pred_fallthru
              _
            // Predicated region
            $region71: #{ltocf_predict.1} parent=58 // pred_check
              _
            $region72: #{ltocf_predict.1} parent=58 // pred_check_branch
              %296 = sbr.rel target = $region74
            $region73: #{ltocf_predict.1} parent=58 // pred_region
              _
            $region74: #{ltocf_predict.1} parent=58 // pred_fallthru
              _
          $region59: #{ltocf_predict.1} parent=54 // pred_fallthru
            _
          %297 = vnop
        $region55: #{ltocf_predict.1} parent=27 // pred_fallthru
          _
      $region28: #{ltocf_predict.1} parent=5 // pred_fallthru
        _
      %p298 = scmp.le.s32.totalorder 1, %s15
      %p299 = scmp.lt.s32.totalorder %s15, 3
      %p300 = pnand %p298, %p299
      %p301 = pneg %p300
      // Predicated region
      $region75: #{ltocf_predict.1} parent=5 // pred_check
        _
      $region76: #{ltocf_predict.1} parent=5 // pred_check_branch
        %303 = sbr.rel (%p300) target = $region78
      $region77: #{ltocf_predict.1} parent=5 // pred_region
        %s304 = ssub.s32 %s15, 1
        %s305 = sand.u32 %s28, 1
        %s306 = sand.u32 %s28, 1
        %s307 = smul.addr %s306, 128
        %s308 = scalar_lea.vmem [#allocation3], %s307
        // Predicated region
        $region79: #{ltocf_predict.1} parent=77 // pred_check
          %p309 = pneg %p41
        $region80: #{ltocf_predict.1} parent=77 // pred_check_branch
          %311 = sbr.rel (%p309) target = $region82
        $region81: #{ltocf_predict.1} parent=77 // pred_region
          _
        $region82: #{ltocf_predict.1} parent=77 // pred_fallthru
          _
        %s312 = sand.u32 %s54, 1
        %s313 = sand.u32 %s54, 1
        %s314 = smul.addr %s313, 128
        %s315 = scalar_lea.vmem [#allocation4], %s314
        // Predicated region
        $region83: #{ltocf_predict.1} parent=77 // pred_check
          %p316 = pneg %p67
        $region84: #{ltocf_predict.1} parent=77 // pred_check_branch
          %318 = sbr.rel (%p316) target = $region86
        $region85: #{ltocf_predict.1} parent=77 // pred_region
          _
        $region86: #{ltocf_predict.1} parent=77 // pred_fallthru
          _
        %s319 = sand.u32 %s28, 1
        %s320 = sand.u32 %s28, 1
        %s321 = smul.addr %s320, 128
        %s322 = scalar_lea.vmem [#allocation3], %s321
        %p323 = pneg %p41
        %p324 = pneg %p38
        %s325 = sand.u32 %s54, 1
        %s326 = sand.u32 %s54, 1
        %s327 = smul.addr %s326, 128
        %s328 = scalar_lea.vmem [#allocation4], %s327
        %p329 = pneg %p67
        %p330 = pneg %p64
        %p331 = pneg %p88
        %p332 = pneg %p85
        %p333 = pneg %p109
        %p334 = pneg %p106
        %p335 = pneg %p130
        %p336 = pneg %p127
        %p337 = pneg %p156
        %p338 = pneg %p153
        %s339 = sand.u32 %s143, 1
        %s340 = scalar_lea.sflag [#allocation6], %s339
        %s341 = sand.u32 %s143, 1
        %s342 = smul.addr %s341, 2
        %s343 = scalar_lea.vmem [#allocation5], %s342
        %s344 = smul.u32 2, %s20
        %s345 = smul.u32 2, %s20
        %s346 = smul.u32 2, %s20
        %v347 = vld [vmem:[%s315] sm:$0xff]
        %v348 = vld [vmem:[%s315 + $0x8] sm:$0xff]
        %v349 = vld [vmem:[%s315 + $0x10] sm:$0xff]
        %v350 = vld [vmem:[%s315 + $0x18] sm:$0xff]
        %v351 = vld [vmem:[%s315 + $0x20] sm:$0xff]
        %v352 = vld [vmem:[%s315 + $0x28] sm:$0xff]
        %v353 = vld [vmem:[%s315 + $0x30] sm:$0xff]
        %v354 = vld [vmem:[%s315 + $0x38] sm:$0xff]
        %v355 = vld [vmem:[%s315 + $0x40] sm:$0xff]
        %v356 = vld [vmem:[%s315 + $0x48] sm:$0xff]
        %v357 = vld [vmem:[%s315 + $0x50] sm:$0xff]
        %v358 = vld [vmem:[%s315 + $0x58] sm:$0xff]
        %v359 = vld [vmem:[%s315 + $0x60] sm:$0xff]
        %v360 = vld [vmem:[%s315 + $0x68] sm:$0xff]
        %v361 = vld [vmem:[%s315 + $0x70] sm:$0xff]
        %v362 = vld [vmem:[%s315 + $0x78] sm:$0xff]
        %v363 = vld [vmem:[%s2] sm:$0xff]
        %v364 = vld [vmem:[%s2 + $0x8] sm:$0xff]
        %v365 = vld [vmem:[%s2 + $0x10] sm:$0xff]
        %v366 = vld [vmem:[%s2 + $0x18] sm:$0xff]
        %v367 = vld [vmem:[%s2 + $0x20] sm:$0xff]
        %v368 = vld [vmem:[%s2 + $0x28] sm:$0xff]
        %v369 = vld [vmem:[%s2 + $0x30] sm:$0xff]
        %v370 = vld [vmem:[%s2 + $0x38] sm:$0xff]
        %vm371 = vcmask 523264
        %v373 = vsel %vm371, %v363, 0
        %v376 = vsel %vm371, %v364, 0
        %v379 = vsel %vm371, %v365, 0
        %v382 = vsel %vm371, %v366, 0
        %v385 = vsel %vm371, %v367, 0
        %v388 = vsel %vm371, %v368, 0
        %v391 = vsel %vm371, %v369, 0
        %v394 = vsel %vm371, %v370, 0
        %396 = vmatprep.subr.mxu0 %v348
        %397 = vmatpush1.msra.mxu0 %v347
        %398 = vmatprep.subr.mxu0 %v350
        %399 = vmatpush1.msra.mxu0 %v349
        %400 = vmatprep.subr.mxu0 %v352
        %401 = vmatpush1.msra.mxu0 %v351
        %402 = vmatprep.subr.mxu0 %v354
        %403 = vmatpush1.msra.mxu0 %v353
        %404 = vmatprep.subr.mxu0 %v356
        %405 = vmatpush1.msra.mxu0 %v355
        %406 = vmatprep.subr.mxu0 %v358
        %407 = vmatpush1.msra.mxu0 %v357
        %408 = vmatprep.subr.mxu0 %v360
        %409 = vmatpush1.msra.mxu0 %v359
        %410 = vmatprep.subr.mxu0 %v362
        %411 = vmatpush1.msra.mxu0 %v361
        %412 = vmatprep.subr.mxu0 0.0
        %413 = vmatpush1.msra.mxu0 0.0
        %414 = vmatprep.subr.mxu0 0.0
        %415 = vmatpush1.msra.mxu0 0.0
        %416 = vmatprep.subr.mxu0 0.0
        %417 = vmatpush1.msra.mxu0 0.0
        %418 = vmatprep.subr.mxu0 0.0
        %419 = vmatpush1.msra.mxu0 0.0
        %420 = vmatprep.subr.mxu0 0.0
        %421 = vmatpush1.msra.mxu0 0.0
        %422 = vmatprep.subr.mxu0 0.0
        %423 = vmatpush1.msra.mxu0 0.0
        %424 = vmatprep.subr.mxu0 0.0
        %425 = vmatpush1.msra.mxu0 0.0
        %426 = vmatprep.subr.mxu0 0.0
        %427 = vmatpush1.msra.mxu0 0.0
        %428 = vmatprep.subr.mxu0 0.0
        %429 = vmatpush1.msra.mxu0 0.0
        %430 = vmatprep.subr.mxu0 0.0
        %431 = vmatpush1.msra.mxu0 0.0
        %432 = vmatprep.subr.mxu0 0.0
        %433 = vmatpush1.msra.mxu0 0.0
        %434 = vmatprep.subr.mxu0 0.0
        %435 = vmatpush1.msra.mxu0 0.0
        %436 = vmatprep.subr.mxu0 0.0
        %437 = vmatpush1.msra.mxu0 0.0
        %438 = vmatprep.subr.mxu0 0.0
        %439 = vmatpush1.msra.mxu0 0.0
        %440 = vmatprep.subr.mxu0 0.0
        %441 = vmatpush1.msra.mxu0 0.0
        %442 = vmatprep.subr.mxu0 0.0
        %443 = vmatpush1.msra.mxu0 0.0
        %444 = vmatprep.subr.mxu0 0.0
        %445 = vmatpush1.msra.mxu0 0.0
        %446 = vmatprep.subr.mxu0 0.0
        %447 = vmatpush1.msra.mxu0 0.0
        %448 = vmatprep.subr.mxu0 0.0
        %449 = vmatpush1.msra.mxu0 0.0
        %450 = vmatprep.subr.mxu0 0.0
        %451 = vmatpush1.msra.mxu0 0.0
        %452 = vmatprep.subr.mxu0 0.0
        %453 = vmatpush1.msra.mxu0 0.0
        %454 = vmatprep.subr.mxu0 0.0
        %455 = vmatpush1.msra.mxu0 0.0
        %456 = vmatprep.subr.mxu0 0.0
        %457 = vmatpush1.msra.mxu0 0.0
        %458 = vmatprep.subr.mxu0 0.0
        %459 = vmatpush1.msra.mxu0 0.0
        %460 = vmatprep.mubr.f32.mxu0 0.0
        %461 = vmatmul.mubr.f32.gmra.mrb[0].mxu0 %v373
        %v462 = vpop.f32.mrb[0].mxu0
        %v463 = vadd.f32 0.0, %v462
        %v464 = vpop.f32.mrb[0].mxu0
        %v465 = vadd.f32 0.0, %v464
        %466 = vmatprep.mubr.f32.mxu0 0.0
        %467 = vmatmul.mubr.f32.gmra.mrb[0].mxu0 %v376
        %v468 = vpop.f32.mrb[0].mxu0
        %v469 = vadd.f32 0.0, %v468
        %v470 = vpop.f32.mrb[0].mxu0
        %v471 = vadd.f32 0.0, %v470
        %472 = vmatprep.mubr.f32.mxu0 0.0
        %473 = vmatmul.mubr.f32.gmra.mrb[0].mxu0 %v379
        %v474 = vpop.f32.mrb[0].mxu0
        %v475 = vadd.f32 0.0, %v474
        %v476 = vpop.f32.mrb[0].mxu0
        %v477 = vadd.f32 0.0, %v476
        %478 = vmatprep.mubr.f32.mxu0 0.0
        %479 = vmatmul.mubr.f32.gmra.mrb[0].mxu0 %v382
        %v480 = vpop.f32.mrb[0].mxu0
        %v481 = vadd.f32 0.0, %v480
        %v482 = vpop.f32.mrb[0].mxu0
        %v483 = vadd.f32 0.0, %v482
        %484 = vmatprep.mubr.f32.mxu0 0.0
        %485 = vmatmul.mubr.f32.gmra.mrb[0].mxu0 %v385
        %v486 = vpop.f32.mrb[0].mxu0
        %v487 = vadd.f32 0.0, %v486
        %v488 = vpop.f32.mrb[0].mxu0
        %v489 = vadd.f32 0.0, %v488
        %490 = vmatprep.mubr.f32.mxu0 0.0
        %491 = vmatmul.mubr.f32.gmra.mrb[0].mxu0 %v388
        %v492 = vpop.f32.mrb[0].mxu0
        %v493 = vadd.f32 0.0, %v492
        %v494 = vpop.f32.mrb[0].mxu0
        %v495 = vadd.f32 0.0, %v494
        %496 = vmatprep.mubr.f32.mxu0 0.0
        %497 = vmatmul.mubr.f32.gmra.mrb[0].mxu0 %v391
        %v498 = vpop.f32.mrb[0].mxu0
        %v499 = vadd.f32 0.0, %v498
        %v500 = vpop.f32.mrb[0].mxu0
        %v501 = vadd.f32 0.0, %v500
        %502 = vmatprep.mubr.f32.mxu0 0.0
        %503 = vmatmul.mubr.f32.gmra.mrb[0].mxu0 %v394
        %v504 = vpop.f32.mrb[0].mxu0
        %v505 = vadd.f32 0.0, %v504
        %v506 = vpop.f32.mrb[0].mxu0
        %v507 = vadd.f32 0.0, %v506
        %508 = vdwg.mxu0
        %v509 = vld [vmem:[%s308] sm:$0xff]
        %v510 = vld [vmem:[%s308 + $0x8] sm:$0xff]
        %v511 = vld [vmem:[%s308 + $0x10] sm:$0xff]
        %v512 = vld [vmem:[%s308 + $0x18] sm:$0xff]
        %v513 = vld [vmem:[%s308 + $0x20] sm:$0xff]
        %v514 = vld [vmem:[%s308 + $0x28] sm:$0xff]
        %v515 = vld [vmem:[%s308 + $0x30] sm:$0xff]
        %v516 = vld [vmem:[%s308 + $0x38] sm:$0xff]
        %v517 = vld [vmem:[%s308 + $0x40] sm:$0xff]
        %v518 = vld [vmem:[%s308 + $0x48] sm:$0xff]
        %v519 = vld [vmem:[%s308 + $0x50] sm:$0xff]
        %v520 = vld [vmem:[%s308 + $0x58] sm:$0xff]
        %v521 = vld [vmem:[%s308 + $0x60] sm:$0xff]
        %v522 = vld [vmem:[%s308 + $0x68] sm:$0xff]
        %v523 = vld [vmem:[%s308 + $0x70] sm:$0xff]
        %v524 = vld [vmem:[%s308 + $0x78] sm:$0xff]
        %v525 = vadd.f32 %v347, %v463
        %v526 = vadd.f32 %v348, %v465
        %v527 = vadd.f32 %v349, %v469
        %v528 = vadd.f32 %v350, %v471
        %v529 = vadd.f32 %v351, %v475
        %v530 = vadd.f32 %v352, %v477
        %v531 = vadd.f32 %v353, %v481
        %v532 = vadd.f32 %v354, %v483
        %v533 = vadd.f32 %v355, %v487
        %v534 = vadd.f32 %v356, %v489
        %v535 = vadd.f32 %v357, %v493
        %v536 = vadd.f32 %v358, %v495
        %v537 = vadd.f32 %v359, %v499
        %v538 = vadd.f32 %v360, %v501
        %v539 = vadd.f32 %v361, %v505
        %v540 = vadd.f32 %v362, %v507
        %v541 = vmul.f32 %v509, %v525
        %v542 = vmul.f32 %v510, %v526
        %v543 = vmul.f32 %v511, %v527
        %v544 = vmul.f32 %v512, %v528
        %v545 = vmul.f32 %v513, %v529
        %v546 = vmul.f32 %v514, %v530
        %v547 = vmul.f32 %v515, %v531
        %v548 = vmul.f32 %v516, %v532
        %v549 = vmul.f32 %v517, %v533
        %v550 = vmul.f32 %v518, %v534
        %v551 = vmul.f32 %v519, %v535
        %v552 = vmul.f32 %v520, %v536
        %v553 = vmul.f32 %v521, %v537
        %v554 = vmul.f32 %v522, %v538
        %v555 = vmul.f32 %v523, %v539
        %v556 = vmul.f32 %v524, %v540
        %v557 = vld [vmem:[%s3] sm:$0x1]
        %s558 = sld [smem:[#allocation2]]
        %v559 = vstv %s558
        %v561 = vsel %vm371, %v557, 0
        %563 = vmatprep.subr.mxu0 %v542
        %564 = vmatpush1.msra.mxu0 %v541
        %565 = vmatprep.subr.mxu0 %v544
        %566 = vmatpush1.msra.mxu0 %v543
        %567 = vmatprep.subr.mxu0 %v546
        %568 = vmatpush1.msra.mxu0 %v545
        %569 = vmatprep.subr.mxu0 %v548
        %570 = vmatpush1.msra.mxu0 %v547
        %571 = vmatprep.subr.mxu0 %v550
        %572 = vmatpush1.msra.mxu0 %v549
        %573 = vmatprep.subr.mxu0 %v552
        %574 = vmatpush1.msra.mxu0 %v551
        %575 = vmatprep.subr.mxu0 %v554
        %576 = vmatpush1.msra.mxu0 %v553
        %577 = vmatprep.subr.mxu0 %v556
        %578 = vmatpush1.msra.mxu0 %v555
        %579 = vmatprep.subr.mxu0 0.0
        %580 = vmatpush1.msra.mxu0 0.0
        %581 = vmatprep.subr.mxu0 0.0
        %582 = vmatpush1.msra.mxu0 0.0
        %583 = vmatprep.subr.mxu0 0.0
        %584 = vmatpush1.msra.mxu0 0.0
        %585 = vmatprep.subr.mxu0 0.0
        %586 = vmatpush1.msra.mxu0 0.0
        %587 = vmatprep.subr.mxu0 0.0
        %588 = vmatpush1.msra.mxu0 0.0
        %589 = vmatprep.subr.mxu0 0.0
        %590 = vmatpush1.msra.mxu0 0.0
        %591 = vmatprep.subr.mxu0 0.0
        %592 = vmatpush1.msra.mxu0 0.0
        %593 = vmatprep.subr.mxu0 0.0
        %594 = vmatpush1.msra.mxu0 0.0
        %595 = vmatprep.subr.mxu0 0.0
        %596 = vmatpush1.msra.mxu0 0.0
        %597 = vmatprep.subr.mxu0 0.0
        %598 = vmatpush1.msra.mxu0 0.0
        %599 = vmatprep.subr.mxu0 0.0
        %600 = vmatpush1.msra.mxu0 0.0
        %601 = vmatprep.subr.mxu0 0.0
        %602 = vmatpush1.msra.mxu0 0.0
        %603 = vmatprep.subr.mxu0 0.0
        %604 = vmatpush1.msra.mxu0 0.0
        %605 = vmatprep.subr.mxu0 0.0
        %606 = vmatpush1.msra.mxu0 0.0
        %607 = vmatprep.subr.mxu0 0.0
        %608 = vmatpush1.msra.mxu0 0.0
        %609 = vmatprep.subr.mxu0 0.0
        %610 = vmatpush1.msra.mxu0 0.0
        %611 = vmatprep.subr.mxu0 0.0
        %612 = vmatpush1.msra.mxu0 0.0
        %613 = vmatprep.subr.mxu0 0.0
        %614 = vmatpush1.msra.mxu0 0.0
        %615 = vmatprep.subr.mxu0 0.0
        %616 = vmatpush1.msra.mxu0 0.0
        %617 = vmatprep.subr.mxu0 0.0
        %618 = vmatpush1.msra.mxu0 0.0
        %619 = vmatprep.subr.mxu0 0.0
        %620 = vmatpush1.msra.mxu0 0.0
        %621 = vmatprep.subr.mxu0 0.0
        %622 = vmatpush1.msra.mxu0 0.0
        %623 = vmatprep.subr.mxu0 0.0
        %624 = vmatpush1.msra.mxu0 0.0
        %625 = vmatprep.subr.mxu0 0.0
        %626 = vmatpush1.msra.mxu0 0.0
        %627 = vmatprep.mubr.f32.mxu0 0.0
        %628 = vmatmul.mubr.f32.gmra.mrb[0].mxu0 %v561
        %v629 = vpop.f32.mrb[0].mxu0
        %v630 = vadd.f32 %v559, %v629
        %v631 = vpop.f32.mrb[0].mxu0
        %v632 = vadd.f32 %v559, %v631
        %633 = vdwg.mxu0
        %v636 = vcombine.low %v630, %v632
        %v638 = vunpack.c.l.s4 1966171168
        %v639 = vunpack.c.0.s8 %v638
        %v640 = vlaneseq
        %v641 = vshrl.u32 %v640, 7
        %v642 = vsub.s32 %v639, %v641
        %v643 = vrot.slane %v636, %v642
        %v645 = vunpack.c.l.s4 1966171168
        %v646 = vunpack.c.0.s8 %v645
        %v647 = vlaneseq
        %v648 = vshrl.u32 %v647, 7
        %v649 = vsub.s32 %v646, %v648
        %v650 = vrot.slane %v643, %v649
        %v652 = vlaneseq
        %vm653 = vcmp.ge.s32.totalorder %v652, 0
        %vm654 = vcmp.lt.s32.totalorder %v652, 256
        %vm655 = vmand %vm653, %vm654
        %656 = vst.msk [vmem:[%s343] sm:$0x3] %vm655, %v650
        %s657 = sand.u32 %s143, 1
        %s658 = scalar_lea.sflag [#allocation6], %s657
        %s659 = sand.u32 %s143, 1
        %s660 = smul.addr %s659, 2
        %s661 = scalar_lea.vmem [#allocation5], %s660
        // Predicated region
        $region87: #{ltocf_predict.1} parent=77 // pred_check
          %p662 = pneg %p153
        $region88: #{ltocf_predict.1} parent=77 // pred_check_branch
          %664 = sbr.rel (%p662) target = $region90
        $region89: #{ltocf_predict.1} parent=77 // pred_region
          %s665 = smul.u32 2, %s20
          %s667 = ssub.s32 32, 32
          %668 = vsyncadd %s658, %s667
          %s669 = smul.addr %s665, 16
          %s670 = scalar_lea.hbm %s5, %s669
          %s672 = sshll.u32 %s661, 4
          %s673 = int_to_ptr.vmem [resolvable:$true] %s672
          %675 = dma.vmem_to_hbm [thread:$0]  %s673, 32, %s670, %s658
        $region90: #{ltocf_predict.1} parent=77 // pred_fallthru
          _
      $region78: #{ltocf_predict.1} parent=5 // pred_fallthru
        _
      %p676 = scmp.le.s32.totalorder 2, %s15
      // Predicated region
      $region91: #{ltocf_predict.1} parent=5 // pred_check
        %p677 = pneg %p676
      $region92: #{ltocf_predict.1} parent=5 // pred_check_branch
        %679 = sbr.rel (%p677) target = $region94
      $region93: #{ltocf_predict.1} parent=5 // pred_region
        %s680 = ssub.s32 %s15, 2
        // Predicated region
        $region95: #{ltocf_predict.1} parent=93 // pred_check
          %p681 = pneg %p159
        $region96: #{ltocf_predict.1} parent=93 // pred_check_branch
          %683 = sbr.rel (%p681) target = $region98
        $region97: #{ltocf_predict.1} parent=93 // pred_region
          %s684 = sand.u32 %s144, 1
          %s685 = scalar_lea.sflag [#allocation6], %s684
          %s686 = sand.u32 %s144, 1
          %s687 = smul.addr %s686, 2
          %s688 = scalar_lea.vmem [#allocation5], %s687
          %689 = dma.done %s685, 32
        $region98: #{ltocf_predict.1} parent=93 // pred_fallthru
          _
      $region94: #{ltocf_predict.1} parent=5 // pred_fallthru
        _
    $region6: #{ltocf_predict.1} parent=1 // loop_footer
      %s19 = sadd.s32 1, %s15
    $region7: #{ltocf_predict.1} parent=1 // loop_footer_branch
      %14 = sbr.rel target = $region3
    $region8: #{ltocf_predict.1} parent=1 // loop_exit
      _
    %690 = vsyncpa [#allocation6], 1
    %s691 = scalar_lea.sflag [#allocation6], 1
    %692 = vsyncpa %s691, 1

</llo_original>
